<compile_context>
chip_gen: v5e
topology: v5e:2x2
jax: 0.10.0
libtpu: 0.0.40
codegen_flags: <defaults>
</compile_context>

<pallas_src>
import functools
import math

import jax
import jax.numpy as jnp
import numpy as np
from jax import lax
from jax.experimental import pallas as pl
from jax.experimental.pallas import tpu as pltpu


def _round_up(x, m):
    return ((x + m - 1) // m) * m


def _mlm_head_kernel(x_ref, w1_ref, b1_ref, gamma_ref, beta_ref,
                     wdec_ref, bdec_ref, out_ref, h_ref,
                     *, eps, compute_dtype):
    """Grid = (row tiles i [parallel], vocab tiles j [arbitrary, innermost])."""
    j = pl.program_id(1)

    # ---- transform: dense -> gelu -> LayerNorm, computed once per row tile ----
    @pl.when(j == 0)
    def _():
        x = x_ref[...].astype(compute_dtype)
        w1 = w1_ref[...].astype(compute_dtype)
        # nn.Linear applies x @ W1^T with W1 stored (out, in): contract dim1 with dim1.
        h = lax.dot_general(x, w1, (((1,), (1,)), ((), ())),
                            preferred_element_type=jnp.float32)
        h = h + b1_ref[...]                                  # (1, H) broadcast
        # exact erf-gelu (matches torch reference), f32 math
        h = h * 0.5 * (1.0 + lax.erf(h * (1.0 / math.sqrt(2.0))))
        # LayerNorm over last axis (biased variance, eps=1e-5), f32 math
        u = jnp.mean(h, axis=-1, keepdims=True)
        d = h - u
        s = jnp.mean(d * d, axis=-1, keepdims=True)
        h = d * lax.rsqrt(s + eps)                           # rsqrt -> EUP slot
        h = gamma_ref[...] * h + beta_ref[...]               # (1, H) scale / shift
        h_ref[...] = h.astype(h_ref.dtype)                   # cached for all vocab tiles

    # ---- decoder: (TM, H) x (TV, H) contracted over H, + bias ----
    h = h_ref[...]
    wdec = wdec_ref[...].astype(h_ref.dtype)
    out = lax.dot_general(h, wdec, (((1,), (1,)), ((), ())),
                          preferred_element_type=jnp.float32)
    out = out + bdec_ref[...]                                # (1, TV) broadcast
    out_ref[...] = out.astype(out_ref.dtype)


def bert_only_mlm_head(sequence_output, w1, b1, gamma, beta,
                       embedding_weights, decoder_bias,
                       *, tm=256, tv=512, eps=1e-5,
                       matmul_dtype=jnp.bfloat16):
    """sequence_output: (B, S, H); w1: (H, H) (out,in); embedding_weights: (V, H)."""
    B, S, H = sequence_output.shape
    V = embedding_weights.shape[0]
    M = B * S

    x2 = sequence_output.reshape(M, H)

    # Tile sizes clamped to the (aligned) problem size.
    TM = min(tm, _round_up(M, 8))
    TV = min(tv, _round_up(V, 128))
    M_pad = _round_up(M, TM)
    V_pad = _round_up(V, TV)

    if M_pad != M:
        x2 = jnp.pad(x2, ((0, M_pad - M), (0, 0)))
    wdec = embedding_weights
    bdec = decoder_bias
    if V_pad != V:
        # TODO(synk): in production, pad (and bf16-cast) the embedding table once at
        # weight-load time instead of per call, to avoid re-streaming it through HBM.
        wdec = jnp.pad(wdec, ((0, V_pad - V), (0, 0)))
        bdec = jnp.pad(bdec, ((0, V_pad - V),))

    b1_2d = b1.reshape(1, H).astype(jnp.float32)
    gamma_2d = gamma.reshape(1, H).astype(jnp.float32)
    beta_2d = beta.reshape(1, H).astype(jnp.float32)
    bdec_2d = bdec.reshape(1, V_pad).astype(jnp.float32)

    grid = (M_pad // TM, V_pad // TV)

    kernel = functools.partial(_mlm_head_kernel, eps=eps,
                               compute_dtype=matmul_dtype)

    out = pl.pallas_call(
        kernel,
        out_shape=jax.ShapeDtypeStruct((M_pad, V_pad), sequence_output.dtype),
        grid=grid,
        in_specs=[
            pl.BlockSpec((TM, H), lambda i, j: (i, 0)),    # x row tile
            pl.BlockSpec((H, H), lambda i, j: (0, 0)),     # W1 (out, in), resident
            pl.BlockSpec((1, H), lambda i, j: (0, 0)),     # b1
            pl.BlockSpec((1, H), lambda i, j: (0, 0)),     # gamma
            pl.BlockSpec((1, H), lambda i, j: (0, 0)),     # beta
            pl.BlockSpec((TV, H), lambda i, j: (j, 0)),    # decoder weight tile (V,H) layout
            pl.BlockSpec((1, TV), lambda i, j: (0, j)),    # decoder bias tile
        ],
        out_specs=pl.BlockSpec((TM, TV), lambda i, j: (i, j)),
        scratch_shapes=[pltpu.VMEM((TM, H), matmul_dtype)],  # cached transform output
        compiler_params=pltpu.CompilerParams(
            dimension_semantics=("parallel", "arbitrary")),
    )(x2, w1, b1_2d, gamma_2d, beta_2d, wdec, bdec_2d)

    out = out[:M, :V]
    return out.reshape(B, S, V)


def _reference(sequence_output, w1, b1, gamma, beta, embedding_weights,
               decoder_bias, eps=1e-5):
    x = sequence_output
    h = jnp.einsum("bsh,oh->bso", x, w1) + b1
    h = h * 0.5 * (1.0 + lax.erf(h / math.sqrt(2.0)))
    u = jnp.mean(h, axis=-1, keepdims=True)
    s = jnp.mean((h - u) ** 2, axis=-1, keepdims=True)
    h = (h - u) / jnp.sqrt(s + eps)
    h = gamma * h + beta
    return jnp.einsum("bsh,vh->bsv", h, embedding_weights) + decoder_bias


if __name__ == "__main__":
    # Small shapes consistent with the module: batch=2, seq=8, hidden=32, vocab=128.
    B, S, H, V = 2, 8, 32, 128

    key = jax.random.PRNGKey(0)
    k_x, k_w1, k_b1, k_emb = jax.random.split(key, 4)

    sequence_output = jax.random.normal(k_x, (B, S, H), dtype=jnp.float32)

    # Deterministic synthetic parameters (shapes from BertOnlyMLMHead.__init__).
    w1 = 0.02 * jax.random.normal(k_w1, (H, H), dtype=jnp.float32)      # dense.weight (out,in)
    b1 = 0.01 * jax.random.normal(k_b1, (H,), dtype=jnp.float32)        # dense.bias
    gamma = jnp.ones((H,), dtype=jnp.float32)                           # LayerNorm.weight
    beta = jnp.zeros((H,), dtype=jnp.float32)                           # LayerNorm.bias
    embedding_weights = 0.02 * jax.random.normal(k_emb, (V, H), dtype=jnp.float32)
    decoder_bias = jnp.zeros((V,), dtype=jnp.float32)                   # predictions.bias

    scores = bert_only_mlm_head(sequence_output, w1, b1, gamma, beta,
                                embedding_weights, decoder_bias)
    jax.block_until_ready(scores)
    assert scores.shape == (B, S, V)

    # Sanity check against a pure-JAX reference (loose tol: bf16 MXU operands).
    ref = _reference(sequence_output, w1, b1, gamma, beta,
                     embedding_weights, decoder_bias)
    assert np.allclose(np.asarray(scores), np.asarray(ref), atol=5e-2, rtol=5e-2)

    print("KERNEL_OK")
</pallas_src>

<mosaic_0001>
module attributes {stable_mosaic.version = 11 : i64} {
  func.func @_mlm_head_kernel(%arg0: i32, %arg1: i32, %arg2: memref<16x32xf32, #tpu.memory_space<vmem>>, %arg3: memref<32x32xf32, #tpu.memory_space<vmem>>, %arg4: memref<1x32xf32, #tpu.memory_space<vmem>>, %arg5: memref<1x32xf32, #tpu.memory_space<vmem>>, %arg6: memref<1x32xf32, #tpu.memory_space<vmem>>, %arg7: memref<128x32xf32, #tpu.memory_space<vmem>>, %arg8: memref<1x128xf32, #tpu.memory_space<vmem>>, %arg9: memref<16x128xf32, #tpu.memory_space<vmem>>, %arg10: memref<16x32xbf16, #tpu.memory_space<vmem>>) attributes {dimension_semantics = [#tpu.dimension_semantics<parallel>, #tpu.dimension_semantics<arbitrary>], iteration_bounds = array<i64: 1, 1>, scalar_prefetch = 0 : i64, scratch_operands = 1 : i64, tpu.core_type = #tpu.core_type<tc>, window_params = [{transform_indices = @transform_0, window_bounds = array<i64: 16, 32>}, {pipeline_mode = #tpu.pipeline_mode<synchronous>, transform_indices = @transform_1, window_bounds = array<i64: 32, 32>}, {pipeline_mode = #tpu.pipeline_mode<synchronous>, transform_indices = @transform_2, window_bounds = array<i64: 1, 32>}, {pipeline_mode = #tpu.pipeline_mode<synchronous>, transform_indices = @transform_3, window_bounds = array<i64: 1, 32>}, {pipeline_mode = #tpu.pipeline_mode<synchronous>, transform_indices = @transform_4, window_bounds = array<i64: 1, 32>}, {transform_indices = @transform_5, window_bounds = array<i64: 128, 32>}, {transform_indices = @transform_6, window_bounds = array<i64: 1, 128>}, {transform_indices = @transform_7, window_bounds = array<i64: 16, 128>}]} {
    %c0_i32 = arith.constant 0 : i32
    %0 = arith.cmpi eq, %arg1, %c0_i32 : i32
    %1 = arith.extui %0 : i1 to i32
    %c0_i32_0 = arith.constant 0 : i32
    %2 = arith.cmpi ne, %1, %c0_i32_0 : i32
    scf.if %2 {
      %c0_8 = arith.constant 0 : index
      %c0_9 = arith.constant 0 : index
      %11 = vector.load %arg2[%c0_8, %c0_9] : memref<16x32xf32, #tpu.memory_space<vmem>>, vector<16x32xf32>
      %12 = arith.truncf %11 : vector<16x32xf32> to vector<16x32xbf16>
      %c0_10 = arith.constant 0 : index
      %c0_11 = arith.constant 0 : index
      %13 = vector.load %arg3[%c0_10, %c0_11] : memref<32x32xf32, #tpu.memory_space<vmem>>, vector<32x32xf32>
      %14 = arith.truncf %13 : vector<32x32xf32> to vector<32x32xbf16>
      %cst_12 = arith.constant dense<0.000000e+00> : vector<16x32xf32>
      %15 = tpu.matmul %12, %14, %cst_12 {dimension_numbers = #tpu.dot_dimension_numbers<[1], [1], [0], [0], [0, 0, 1, 0], [], []>} : vector<16x32xbf16>, vector<32x32xbf16>, vector<16x32xf32> -> vector<16x32xf32>
      %c0_13 = arith.constant 0 : index
      %c0_14 = arith.constant 0 : index
      %16 = vector.load %arg4[%c0_13, %c0_14] : memref<1x32xf32, #tpu.memory_space<vmem>>, vector<1x32xf32>
      %17 = vector.broadcast %16 : vector<1x32xf32> to vector<16x32xf32>
      %18 = arith.addf %15, %17 : vector<16x32xf32>
      %cst_15 = arith.constant 5.000000e-01 : f32
      %19 = vector.broadcast %cst_15 : f32 to vector<16x32xf32>
      %20 = arith.mulf %18, %19 : vector<16x32xf32>
      %cst_16 = arith.constant 0.707106769 : f32
      %21 = vector.broadcast %cst_16 : f32 to vector<16x32xf32>
      %22 = arith.mulf %18, %21 : vector<16x32xf32>
      %23 = math.erf %22 : vector<16x32xf32>
      %cst_17 = arith.constant 1.000000e+00 : f32
      %24 = vector.broadcast %cst_17 : f32 to vector<16x32xf32>
      %25 = arith.addf %24, %23 : vector<16x32xf32>
      %26 = arith.mulf %20, %25 : vector<16x32xf32>
      %cst_18 = arith.constant dense<0.000000e+00> : vector<16xf32>
      %27 = vector.multi_reduction <add>, %26, %cst_18 [1] : vector<16x32xf32> to vector<16xf32>
      %28 = vector.shape_cast %27 : vector<16xf32> to vector<16x1xf32>
      %cst_19 = arith.constant 3.200000e+01 : f32
      %29 = vector.broadcast %cst_19 : f32 to vector<16x1xf32>
      %30 = arith.divf %28, %29 : vector<16x1xf32>
      %31 = vector.broadcast %30 : vector<16x1xf32> to vector<16x32xf32>
      %32 = arith.subf %26, %31 : vector<16x32xf32>
      %33 = arith.mulf %32, %32 : vector<16x32xf32>
      %cst_20 = arith.constant dense<0.000000e+00> : vector<16xf32>
      %34 = vector.multi_reduction <add>, %33, %cst_20 [1] : vector<16x32xf32> to vector<16xf32>
      %35 = vector.shape_cast %34 : vector<16xf32> to vector<16x1xf32>
      %cst_21 = arith.constant 3.200000e+01 : f32
      %36 = vector.broadcast %cst_21 : f32 to vector<16x1xf32>
      %37 = arith.divf %35, %36 : vector<16x1xf32>
      %cst_22 = arith.constant 9.99999974E-6 : f32
      %38 = vector.broadcast %cst_22 : f32 to vector<16x1xf32>
      %39 = arith.addf %37, %38 : vector<16x1xf32>
      %40 = math.rsqrt %39 : vector<16x1xf32>
      %41 = vector.broadcast %40 : vector<16x1xf32> to vector<16x32xf32>
      %42 = arith.mulf %32, %41 : vector<16x32xf32>
      %c0_23 = arith.constant 0 : index
      %c0_24 = arith.constant 0 : index
      %43 = vector.load %arg5[%c0_23, %c0_24] : memref<1x32xf32, #tpu.memory_space<vmem>>, vector<1x32xf32>
      %44 = vector.broadcast %43 : vector<1x32xf32> to vector<16x32xf32>
      %45 = arith.mulf %44, %42 : vector<16x32xf32>
      %c0_25 = arith.constant 0 : index
      %c0_26 = arith.constant 0 : index
      %46 = vector.load %arg6[%c0_25, %c0_26] : memref<1x32xf32, #tpu.memory_space<vmem>>, vector<1x32xf32>
      %47 = vector.broadcast %46 : vector<1x32xf32> to vector<16x32xf32>
      %48 = arith.addf %45, %47 : vector<16x32xf32>
      %49 = arith.truncf %48 : vector<16x32xf32> to vector<16x32xbf16>
      %c0_27 = arith.constant 0 : index
      %c0_28 = arith.constant 0 : index
      %50 = vector.load %arg10[%c0_27, %c0_28] : memref<16x32xbf16, #tpu.memory_space<vmem>>, vector<16x32xbf16>
      tpu.vector_store %arg10[%c0_27, %c0_28], %49 {strides = array<i32>} : memref<16x32xbf16, #tpu.memory_space<vmem>>, vector<16x32xbf16>,
    } else {
    }
    %c0 = arith.constant 0 : index
    %c0_1 = arith.constant 0 : index
    %3 = vector.load %arg10[%c0, %c0_1] : memref<16x32xbf16, #tpu.memory_space<vmem>>, vector<16x32xbf16>
    %c0_2 = arith.constant 0 : index
    %c0_3 = arith.constant 0 : index
    %4 = vector.load %arg7[%c0_2, %c0_3] : memref<128x32xf32, #tpu.memory_space<vmem>>, vector<128x32xf32>
    %5 = arith.truncf %4 : vector<128x32xf32> to vector<128x32xbf16>
    %cst = arith.constant dense<0.000000e+00> : vector<16x128xf32>
    %6 = tpu.matmul %3, %5, %cst {dimension_numbers = #tpu.dot_dimension_numbers<[1], [1], [0], [0], [0, 0, 1, 0], [], []>} : vector<16x32xbf16>, vector<128x32xbf16>, vector<16x128xf32> -> vector<16x128xf32>
    %c0_4 = arith.constant 0 : index
    %c0_5 = arith.constant 0 : index
    %7 = vector.load %arg8[%c0_4, %c0_5] : memref<1x128xf32, #tpu.memory_space<vmem>>, vector<1x128xf32>
    %8 = vector.broadcast %7 : vector<1x128xf32> to vector<16x128xf32>
    %9 = arith.addf %6, %8 : vector<16x128xf32>
    %c0_6 = arith.constant 0 : index
    %c0_7 = arith.constant 0 : index
    %10 = vector.load %arg9[%c0_6, %c0_7] : memref<16x128xf32, #tpu.memory_space<vmem>>, vector<16x128xf32>
    tpu.vector_store %arg9[%c0_6, %c0_7], %9 {strides = array<i32>} : memref<16x128xf32, #tpu.memory_space<vmem>>, vector<16x128xf32>,
    return
  }
  func.func @transform_0(%arg0: i32, %arg1: i32) -> (i32, i32) {
    %c0_i32 = arith.constant 0 : i32
    %c0_i32_0 = arith.constant 0 : i32
    return %arg0, %c0_i32 : i32, i32
  }
  func.func @transform_1(%arg0: i32, %arg1: i32) -> (i32, i32) {
    %c0_i32 = arith.constant 0 : i32
    %c0_i32_0 = arith.constant 0 : i32
    %c0_i32_1 = arith.constant 0 : i32
    return %c0_i32, %c0_i32_0 : i32, i32
  }
  func.func @transform_2(%arg0: i32, %arg1: i32) -> (i32, i32) {
    %c0_i32 = arith.constant 0 : i32
    %c0_i32_0 = arith.constant 0 : i32
    %c0_i32_1 = arith.constant 0 : i32
    return %c0_i32, %c0_i32_0 : i32, i32
  }
  func.func @transform_3(%arg0: i32, %arg1: i32) -> (i32, i32) {
    %c0_i32 = arith.constant 0 : i32
    %c0_i32_0 = arith.constant 0 : i32
    %c0_i32_1 = arith.constant 0 : i32
    return %c0_i32, %c0_i32_0 : i32, i32
  }
  func.func @transform_4(%arg0: i32, %arg1: i32) -> (i32, i32) {
    %c0_i32 = arith.constant 0 : i32
    %c0_i32_0 = arith.constant 0 : i32
    %c0_i32_1 = arith.constant 0 : i32
    return %c0_i32, %c0_i32_0 : i32, i32
  }
  func.func @transform_5(%arg0: i32, %arg1: i32) -> (i32, i32) {
    %c0_i32 = arith.constant 0 : i32
    %c0_i32_0 = arith.constant 0 : i32
    return %arg1, %c0_i32 : i32, i32
  }
  func.func @transform_6(%arg0: i32, %arg1: i32) -> (i32, i32) {
    %c0_i32 = arith.constant 0 : i32
    %c0_i32_0 = arith.constant 0 : i32
    return %c0_i32, %arg1 : i32, i32
  }
  func.func @transform_7(%arg0: i32, %arg1: i32) -> (i32, i32) {
    %c0_i32 = arith.constant 0 : i32
    return %arg0, %arg1 : i32, i32
  }
}

</mosaic_0001>

<llo_original>
// kernel: tpu_custom_call.1
$region0: #{tpu_custom_call.1}
  #allocation0 [shape = 'u32[]', space=smem, size = 0x4, offset = 0x4, fixed_abs, tag = 'smem constant byte address 0x4 - core index']
  #allocation1 [shape = 'u32[72,128]{1,0:T(1,128)}', space=vmem, size = 0x9000, scoped, tag = 'internal scratch']
  #allocation2 [shape = 'bf16[16,32]{1,0:T(8,128)(2,1)}', space=vmem, size = 0x1000, scoped, tag = 'scratch operand']
  %s0 = inlined_call_operand.vmem [shape: f32[16,32], index: 0, kind: input, shape index: {}]
  %s1 = inlined_call_operand.vmem [shape: f32[32,32], index: 1, kind: input, shape index: {}]
  %s2 = inlined_call_operand.vmem [shape: f32[1,32], index: 2, kind: input, shape index: {}]
  %s3 = inlined_call_operand.vmem [shape: f32[1,32], index: 3, kind: input, shape index: {}]
  %s4 = inlined_call_operand.vmem [shape: f32[1,32], index: 4, kind: input, shape index: {}]
  %s5 = inlined_call_operand.vmem [shape: f32[128,32], index: 5, kind: input, shape index: {}]
  %s6 = inlined_call_operand.vmem [shape: f32[1,128], index: 6, kind: input, shape index: {}]
  %s7 = inlined_call_operand.hbm [shape: f32[16,128], index: 7, kind: output, shape index: {}]
  %s8 = sld [smem:[#allocation0]]
  $region42: #{tpu_custom_call.1} parent=0
    _
  %s10 = ssub.s32 1, %s8
  %s11 = scalar_select 0, %s10, %s8
  $region1: #{tpu_custom_call.1} parent=0
    #allocation3 [shape = 'u8[8192]{0}', space=vmem, size = 0x2000, scoped, tag = 'output window, operand 0, single buffered']
    #allocation4 [shape = 's32[1]{0}', space=sflag, size = 0x4, scoped, tag = 'scoped memory for tpu_custom_call.1']
    %12 = vsyncpa [#allocation4], 0
    // Predicated region
    $region2: #{tpu_custom_call.1} parent=1 // pred_check
      _
    $region3: #{tpu_custom_call.1} parent=1 // pred_check_branch
      %14 = sbr.rel (0) target = $region5
    $region4: #{tpu_custom_call.1} parent=1 // pred_region
      _
    $region5: #{tpu_custom_call.1} parent=1 // pred_fallthru
      _
    // Predicated region
    $region6: #{tpu_custom_call.1} parent=1 // pred_check
      _
    $region7: #{tpu_custom_call.1} parent=1 // pred_check_branch
      %16 = sbr.rel (0) target = $region9
    $region8: #{tpu_custom_call.1} parent=1 // pred_region
      _
    $region9: #{tpu_custom_call.1} parent=1 // pred_fallthru
      _
    // Predicated region
    $region10: #{tpu_custom_call.1} parent=1 // pred_check
      _
    $region11: #{tpu_custom_call.1} parent=1 // pred_check_branch
      %18 = sbr.rel (0) target = $region13
    $region12: #{tpu_custom_call.1} parent=1 // pred_region
      _
    $region13: #{tpu_custom_call.1} parent=1 // pred_fallthru
      _
    // Predicated region
    $region14: #{tpu_custom_call.1} parent=1 // pred_check
      _
    $region15: #{tpu_custom_call.1} parent=1 // pred_check_branch
      %20 = sbr.rel (0) target = $region17
    $region16: #{tpu_custom_call.1} parent=1 // pred_region
      _
    $region17: #{tpu_custom_call.1} parent=1 // pred_fallthru
      _
    // Predicated region
    $region18: #{tpu_custom_call.1} parent=1 // pred_check
      _
    $region19: #{tpu_custom_call.1} parent=1 // pred_check_branch
      %22 = sbr.rel (0) target = $region21
    $region20: #{tpu_custom_call.1} parent=1 // pred_region
      _
    $region21: #{tpu_custom_call.1} parent=1 // pred_fallthru
      _
    // Predicated region
    $region22: #{tpu_custom_call.1} parent=1 // pred_check
      _
    $region23: #{tpu_custom_call.1} parent=1 // pred_check_branch
      %24 = sbr.rel (0) target = $region25
    $region24: #{tpu_custom_call.1} parent=1 // pred_region
      _
    $region25: #{tpu_custom_call.1} parent=1 // pred_fallthru
      _
    // Predicated region
    $region26: #{tpu_custom_call.1} parent=1 // pred_check
      _
    $region27: #{tpu_custom_call.1} parent=1 // pred_check_branch
      %26 = sbr.rel (0) target = $region29
    $region28: #{tpu_custom_call.1} parent=1 // pred_region
      _
    $region29: #{tpu_custom_call.1} parent=1 // pred_fallthru
      _
    %p28 = scmp.eq.s32.totalorder 0, 0
    // Predicated region
    $region30: #{tpu_custom_call.1} parent=1 // pred_check
      %p29 = pneg %p28
    $region31: #{tpu_custom_call.1} parent=1 // pred_check_branch
      %31 = sbr.rel (%p29) target = $region33
    $region32: #{tpu_custom_call.1} parent=1 // pred_region
      %v32 = vld [vmem:[%s0] sm:$0xff]
      %v33 = vld [vmem:[%s0 + $0x8] sm:$0xff]
      %v34 = vpack.c.bf16 %v33, %v32
      %v35 = vld [vmem:[%s1] sm:$0xff]
      %v36 = vld [vmem:[%s1 + $0x8] sm:$0xff]
      %v37 = vld [vmem:[%s1 + $0x10] sm:$0xff]
      %v38 = vld [vmem:[%s1 + $0x18] sm:$0xff]
      %v39 = vpack.c.bf16 %v36, %v35
      %v40 = vpack.c.bf16 %v38, %v37
      %v41 = vld [vmem:[%s2] sm:$0x1]
      %v43 = vperm.slane %v41, 0
      %vm45 = vcmask 261120
      %v47 = vsel %vm45, %v34, 0
      %v50 = vsel %vm45, %v39, 0
      %v53 = vsel %vm45, %v40, 0
      %55 = vmatpush.bf16.xpose.msra.mxu0 0
      %56 = vmatpush.bf16.xpose.msra.mxu0 0
      %57 = vmatpush.bf16.xpose.msra.mxu0 0
      %58 = vmatpush.bf16.xpose.msra.mxu0 0
      %59 = vmatpush.bf16.xpose.msra.mxu0 0
      %60 = vmatpush.bf16.xpose.msra.mxu0 0
      %61 = vmatpush.bf16.xpose.msra.mxu0 %v53
      %62 = vmatpush.bf16.xpose.msra.mxu0 %v50
      %63 = vmatmul.bf16.gmra.mxu0 %v47
      %v64 = vpop.f32.mrf.mxu0
      %v65 = vadd.f32 %v43, %v64
      %v66 = vpop.f32.mrf.mxu0
      %v67 = vadd.f32 %v43, %v66
      %68 = vdwg.mxu0
      %v69 = vmul.f32 %v65, 0.5
      %v70 = vmul.f32 %v67, 0.5
      %v71 = vmul.f32 %v65, 0.70710677
      %v72 = vmul.f32 %v67, 0.70710677
      %v73 = vmul.f32 %v71, %v71
      %v74 = vmin.f32 16.0, %v73
      %v75 = vmul.f32 %v74, 2.1237322e-06
      %v76 = vadd.f32 %v75, 0.00028619796
      %v77 = vmul.f32 %v74, %v76
      %v78 = vadd.f32 %v77, 0.0036580483
      %v79 = vmul.f32 %v74, %v78
      %v80 = vadd.f32 %v79, 0.05243302
      %v81 = vmul.f32 %v74, %v80
      %v82 = vadd.f32 %v81, 0.18741608
      %v83 = vmul.f32 %v74, %v82
      %v84 = vadd.f32 %v83, 1.1283791
      %v85 = vmul.f32 %v71, %v84
      %v86 = vmul.f32 %v74, 3.8918573e-05
      %v87 = vadd.f32 %v86, 0.001143296
      %v88 = vmul.f32 %v74, %v87
      %v89 = vadd.f32 %v88, 0.014752088
      %v90 = vmul.f32 %v74, %v89
      %v91 = vadd.f32 %v90, 0.112945676
      %v92 = vmul.f32 %v74, %v91
      %v93 = vadd.f32 %v92, 0.4994258
      %v94 = vmul.f32 %v74, %v93
      %v95 = vadd.f32 %v94, 1.0
      %v96 = vrcp.pop %v95
      %v97 = vmul.f32 %v95, %v96
      %v98 = vsub.f32 1.0, %v97
      %v99 = vmul.f32 %v96, %v98
      %v100 = vadd.f32 %v96, %v99
      %vm101 = vweird.f32 %v95
      %vm102 = vweird.f32 %v96
      %vm103 = vmor %vm101, %vm102
      %v104 = vsel %vm103, %v96, %v100
      %v105 = vand.u32 2147483647, %v95
      %vm106 = vcmp.eq.f32.partialorder %v105, 8.507059e+37
      %v107 = vand.u32 %v95, 2147483648
      %v108 = vor.u32 1.1754944e-38, %v107
      %v109 = vsel %vm106, %v108, %v104
      %v110 = vmul.f32 %v85, %v109
      %v111 = vmin.f32 %v110, 1.0
      %v112 = vmax.f32 %v111, -1.0
      %v113 = vmul.f32 %v72, %v72
      %v114 = vmin.f32 16.0, %v113
      %v115 = vmul.f32 %v114, 2.1237322e-06
      %v116 = vadd.f32 %v115, 0.00028619796
      %v117 = vmul.f32 %v114, %v116
      %v118 = vadd.f32 %v117, 0.0036580483
      %v119 = vmul.f32 %v114, %v118
      %v120 = vadd.f32 %v119, 0.05243302
      %v121 = vmul.f32 %v114, %v120
      %v122 = vadd.f32 %v121, 0.18741608
      %v123 = vmul.f32 %v114, %v122
      %v124 = vadd.f32 %v123, 1.1283791
      %v125 = vmul.f32 %v72, %v124
      %v126 = vmul.f32 %v114, 3.8918573e-05
      %v127 = vadd.f32 %v126, 0.001143296
      %v128 = vmul.f32 %v114, %v127
      %v129 = vadd.f32 %v128, 0.014752088
      %v130 = vmul.f32 %v114, %v129
      %v131 = vadd.f32 %v130, 0.112945676
      %v132 = vmul.f32 %v114, %v131
      %v133 = vadd.f32 %v132, 0.4994258
      %v134 = vmul.f32 %v114, %v133
      %v135 = vadd.f32 %v134, 1.0
      %v136 = vrcp.pop %v135
      %v137 = vmul.f32 %v135, %v136
      %v138 = vsub.f32 1.0, %v137
      %v139 = vmul.f32 %v136, %v138
      %v140 = vadd.f32 %v136, %v139
      %vm141 = vweird.f32 %v135
      %vm142 = vweird.f32 %v136
      %vm143 = vmor %vm141, %vm142
      %v144 = vsel %vm143, %v136, %v140
      %v145 = vand.u32 2147483647, %v135
      %vm146 = vcmp.eq.f32.partialorder %v145, 8.507059e+37
      %v147 = vand.u32 %v135, 2147483648
      %v148 = vor.u32 1.1754944e-38, %v147
      %v149 = vsel %vm146, %v148, %v144
      %v150 = vmul.f32 %v125, %v149
      %v151 = vmin.f32 %v150, 1.0
      %v152 = vmax.f32 %v151, -1.0
      %v153 = vadd.f32 %v112, 1.0
      %v154 = vadd.f32 %v152, 1.0
      %v155 = vmul.f32 %v69, %v153
      %v156 = vmul.f32 %v70, %v154
      %v157 = vsel %vm45, %v155, 0.0
      %158 = vadd.xlane.f32.xlu0 %v157
      %v159 = vpop.xlane.xlu0 %158
      %v160 = vsel %vm45, %v156, 0.0
      %161 = vadd.xlane.f32.xlu0 %v160
      %v162 = vpop.xlane.xlu0 %161
      %v163 = vrcp.pop 32.0
      %v164 = vmul.f32 32.0, %v163
      %v165 = vsub.f32 1.0, %v164
      %v166 = vmul.f32 %v163, %v165
      %v167 = vadd.f32 %v163, %v166
      %vm168 = vweird.f32 %v163
      %v169 = vsel %vm168, %v163, %v167
      %v170 = vmul.f32 %v159, %v169
      %v171 = vmul.f32 %v162, %v169
      %v172 = vsub.f32 %v155, %v170
      %v173 = vsub.f32 %v156, %v171
      %v174 = vmul.f32 %v172, %v172
      %v175 = vmul.f32 %v173, %v173
      %v176 = vsel %vm45, %v174, 0.0
      %177 = vadd.xlane.f32.xlu0 %v176
      %v178 = vpop.xlane.xlu0 %177
      %v179 = vsel %vm45, %v175, 0.0
      %180 = vadd.xlane.f32.xlu0 %v179
      %v181 = vpop.xlane.xlu0 %180
      %v182 = vmul.f32 %v178, %v169
      %v183 = vmul.f32 %v181, %v169
      %v184 = vadd.f32 %v182, 1e-05
      %v185 = vadd.f32 %v183, 1e-05
      %v186 = vrsqrt.pop %v184
      %v187 = vmul.f32 %v186, %v184
      %v188 = vmul.f32 %v187, %v186
      %v189 = vmul.f32 0.5, %v188
      %v190 = vsub.f32 1.5, %v189
      %v191 = vmul.f32 %v186, %v190
      %vm192 = vweird.f32 %v184
      %vm193 = vweird.f32 %v186
      %vm194 = vmor %vm192, %vm193
      %v195 = vsel %vm194, %v186, %v191
      %v196 = vrsqrt.pop %v185
      %v197 = vmul.f32 %v196, %v185
      %v198 = vmul.f32 %v197, %v196
      %v199 = vmul.f32 0.5, %v198
      %v200 = vsub.f32 1.5, %v199
      %v201 = vmul.f32 %v196, %v200
      %vm202 = vweird.f32 %v185
      %vm203 = vweird.f32 %v196
      %vm204 = vmor %vm202, %vm203
      %v205 = vsel %vm204, %v196, %v201
      %v206 = vmul.f32 %v172, %v195
      %v207 = vmul.f32 %v173, %v205
      %v208 = vld [vmem:[%s3] sm:$0x1]
      %v210 = vperm.slane %v208, 0
      %v212 = vmul.f32 %v210, %v206
      %v213 = vmul.f32 %v210, %v207
      %v214 = vld [vmem:[%s4] sm:$0x1]
      %v216 = vperm.slane %v214, 0
      %v218 = vadd.f32 %v212, %v216
      %v219 = vadd.f32 %v213, %v216
      %v220 = vpack.c.bf16 %v218, %v218
      %v221 = vpack.c.bf16 %v219, %v219
      %vm222 = vcmask 257024
      %223 = vst.msk [vmem:[#allocation2] sm:$0xf] %vm222, %v220
      %224 = vst.msk [vmem:[#allocation2 + $0x4] sm:$0xf] %vm222, %v221
    $region33: #{tpu_custom_call.1} parent=1 // pred_fallthru
      _
    %v225 = vld [vmem:[#allocation2] sm:$0xf]
    %v226 = vld [vmem:[#allocation2 + $0x4] sm:$0xf]
    %v227 = vld [vmem:[%s5] sm:$0xff]
    %v228 = vld [vmem:[%s5 + $0x8] sm:$0xff]
    %v229 = vld [vmem:[%s5 + $0x10] sm:$0xff]
    %v230 = vld [vmem:[%s5 + $0x18] sm:$0xff]
    %v231 = vld [vmem:[%s5 + $0x20] sm:$0xff]
    %v232 = vld [vmem:[%s5 + $0x28] sm:$0xff]
    %v233 = vld [vmem:[%s5 + $0x30] sm:$0xff]
    %v234 = vld [vmem:[%s5 + $0x38] sm:$0xff]
    %v235 = vld [vmem:[%s5 + $0x40] sm:$0xff]
    %v236 = vld [vmem:[%s5 + $0x48] sm:$0xff]
    %v237 = vld [vmem:[%s5 + $0x50] sm:$0xff]
    %v238 = vld [vmem:[%s5 + $0x58] sm:$0xff]
    %v239 = vld [vmem:[%s5 + $0x60] sm:$0xff]
    %v240 = vld [vmem:[%s5 + $0x68] sm:$0xff]
    %v241 = vld [vmem:[%s5 + $0x70] sm:$0xff]
    %v242 = vld [vmem:[%s5 + $0x78] sm:$0xff]
    %v243 = vpack.c.bf16 %v228, %v227
    %v244 = vpack.c.bf16 %v230, %v229
    %v245 = vpack.c.bf16 %v232, %v231
    %v246 = vpack.c.bf16 %v234, %v233
    %v247 = vpack.c.bf16 %v236, %v235
    %v248 = vpack.c.bf16 %v238, %v237
    %v249 = vpack.c.bf16 %v240, %v239
    %v250 = vpack.c.bf16 %v242, %v241
    %v251 = vld [vmem:[%s6] sm:$0x1]
    %v253 = vperm.slane %v251, 0
    %v257 = vunpack.c.l.b16 %v225
    %v258 = vunpack.c.l.b16 %v226
    %v259 = vpack.c.b16 %v258, %v257
    %vm260 = vcmask 261120
    %v262 = vsel %vm260, %v259, 0
    %v265 = vsel %vm260, %v243, 0
    %v268 = vsel %vm260, %v244, 0
    %v271 = vsel %vm260, %v245, 0
    %v274 = vsel %vm260, %v246, 0
    %v277 = vsel %vm260, %v247, 0
    %v280 = vsel %vm260, %v248, 0
    %v283 = vsel %vm260, %v249, 0
    %v286 = vsel %vm260, %v250, 0
    %288 = vmatpush.bf16.xpose.msra.mxu0 %v286
    %289 = vmatpush.bf16.xpose.msra.mxu0 %v283
    %290 = vmatpush.bf16.xpose.msra.mxu0 %v280
    %291 = vmatpush.bf16.xpose.msra.mxu0 %v277
    %292 = vmatpush.bf16.xpose.msra.mxu0 %v274
    %293 = vmatpush.bf16.xpose.msra.mxu0 %v271
    %294 = vmatpush.bf16.xpose.msra.mxu0 %v268
    %295 = vmatpush.bf16.xpose.msra.mxu0 %v265
    %296 = vmatmul.bf16.gmra.mxu0 %v262
    %v297 = vpop.f32.mrf.mxu0
    %v298 = vadd.f32 %v253, %v297
    %v299 = vpop.f32.mrf.mxu0
    %v300 = vadd.f32 %v253, %v299
    %301 = vdwg.mxu0
    %302 = vst [vmem:[#allocation3] sm:$0xff] %v298
    %303 = vst [vmem:[#allocation3 + $0x8] sm:$0xff] %v300
    // Predicated region
    $region34: #{tpu_custom_call.1} parent=1 // pred_check
      _
    $region35: #{tpu_custom_call.1} parent=1 // pred_check_branch
      %305 = sbr.rel (0) target = $region37
    $region36: #{tpu_custom_call.1} parent=1 // pred_region
      %307 = vsyncadd [#allocation4], 0
      %s308 = sshll.u32 [#allocation3], 4
      %s309 = int_to_ptr.vmem [resolvable:$true] %s308
      %s310 = sshll.u32 %s7, 4
      %s311 = int_to_ptr.hbm [resolvable:$true] %s310
      %316 = dma.vmem_to_hbm [thread:$0]  %s309, 256, %s311, [#allocation4], 128, 128, 8
    $region37: #{tpu_custom_call.1} parent=1 // pred_fallthru
      _
    // Predicated region
    $region38: #{tpu_custom_call.1} parent=1 // pred_check
      _
    $region39: #{tpu_custom_call.1} parent=1 // pred_check_branch
      %318 = sbr.rel (0) target = $region41
    $region40: #{tpu_custom_call.1} parent=1 // pred_region
      %320 = dma.done [#allocation4], 256
    $region41: #{tpu_custom_call.1} parent=1 // pred_fallthru
      _
    %321 = vsyncpa [#allocation4], 1

</llo_original>
